<compile_context>
chip_gen: v7x
topology: tpu7x:2x2x1
jax: 0.10.0
libtpu: 0.0.40
codegen_flags: <defaults>
</compile_context>

<pallas_src>
import functools

import numpy as np
import jax
import jax.numpy as jnp
from jax import lax
from jax.experimental import pallas as pl
from jax.experimental.pallas import tpu as pltpu


# ---------------------------------------------------------------------------
# Phase 1: per-token work, expert-major (E on sublanes, tokens on lanes).
# ---------------------------------------------------------------------------
def _router_tokens_kernel(x_ref, w_ref, b_ref,
                          logits_ref, probs_ref, key_ref, norm_ref,
                          *, k, router_dtype):
    f32 = jnp.float32
    E, tile_t = logits_ref.shape

    x = x_ref[...]                    # (tile_t, D)  native dtype (no f32 upcast)
    w = w_ref[...]                    # (E, D)       native dtype (torch Linear layout)

    # logits_T[e, t] = sum_d w[e, d] * x[t, d]  -- MXU, f32 accumulator.
    logits = lax.dot_general(w, x,
                             dimension_numbers=(((1,), (1,)), ((), ())),
                             preferred_element_type=f32)
    logits = logits + b_ref[...].astype(f32)           # (E, tile_t)
    logits_ref[...] = logits.astype(logits_ref.dtype)  # lane-dense full-tile store

    # Softmax over experts (sublane axis), computed in router_dtype.
    l = logits.astype(router_dtype)
    l = l - jnp.max(l, axis=0, keepdims=True)
    ex = jnp.exp(l)
    probs = ex / jnp.sum(ex, axis=0, keepdims=True)
    probs_ref[...] = probs.astype(probs_ref.dtype)

    # Iterative top-k over experts (ties -> lower expert id); dense vregs.
    probs_f = probs.astype(f32)
    iota_e = lax.broadcasted_iota(jnp.int32, (E, tile_t), 0)
    cur = probs_f
    selected = jnp.zeros((E, tile_t), f32)
    for _ in range(k):
        mx = jnp.max(cur, axis=0, keepdims=True)
        am = jnp.min(jnp.where(cur == mx, iota_e, E), axis=0, keepdims=True)
        selected = selected + (iota_e == am).astype(f32)
        cur = jnp.where(iota_e == am, -jnp.inf, cur)

    # torch: topk_probs.to(x.dtype), then renormalize (cast is a no-op for f32 x).
    probs_x = probs.astype(x.dtype).astype(f32)
    unnorm = selected * probs_x
    norm = unnorm / jnp.sum(unnorm, axis=0, keepdims=True)

    # Ranking key for phase 2: unnormalized prob where routed, -1 where not.
    key_ref[...] = jnp.where(selected > 0.0, unnorm, -1.0)
    norm_ref[...] = norm


# ---------------------------------------------------------------------------
# Phase 2: capacity-limited assignment, batched over a sublane group of experts.
# O(C*T) iterative selection instead of the old O(T^2) all-pairs ranking.
# ---------------------------------------------------------------------------
def _assign_experts_kernel(key_ref, norm_ref, eprobs_ref, eidx_ref, *, capacity):
    f32 = jnp.float32
    Eg, T = key_ref.shape
    Cp = eprobs_ref.shape[1]          # lane-padded capacity (multiple of 128)
    C = capacity

    u = key_ref[...]                  # (Eg, T) ranking key; -1 where not routed here
    n = norm_ref[...]                 # (Eg, T) renormalized top-k probs
    t_iota = lax.broadcasted_iota(jnp.int32, (Eg, T), 1).astype(f32)
    slot_iota = lax.broadcasted_iota(jnp.int32, (Eg, Cp), 1)

    def pick_slot(c, carry):
        cur, probs_acc, idx_acc = carry
        mx = jnp.max(cur, axis=1, keepdims=True)                 # (Eg, 1)
        valid = mx >= 0.0                                        # routed token remains
        am = jnp.min(jnp.where(cur == mx, t_iota, float(T)),
                     axis=1, keepdims=True)                      # lowest-index argmax
        pick = t_iota == am                                      # (Eg, T)
        nval = jnp.sum(jnp.where(pick, n, 0.0), axis=1, keepdims=True)
        at_c = (slot_iota == c) & valid                          # (Eg, Cp)
        probs_acc = jnp.where(at_c, nval, probs_acc)
        idx_acc = jnp.where(at_c, am, idx_acc)
        cur = jnp.where(pick, -1.0, cur)
        return cur, probs_acc, idx_acc

    carry = (u,
             jnp.zeros((Eg, Cp), f32),
             jnp.full((Eg, Cp), -1.0, f32))
    if C <= 32:                       # small static capacity: unroll at trace time
        for c in range(C):
            carry = pick_slot(c, carry)
    else:                             # large capacity: bounded live ranges
        carry = lax.fori_loop(0, C, pick_slot, carry)
    _, probs_acc, idx_acc = carry

    # Single lane-dense full-tile store per output (no per-expert row stores).
    eprobs_ref[...] = probs_acc.astype(eprobs_ref.dtype)
    eidx_ref[...] = idx_acc.astype(jnp.int32)


# ---------------------------------------------------------------------------
# Tiling / VMEM budgeting helpers
# ---------------------------------------------------------------------------
def _pick_token_tile(T, D, itemsize, max_rows=512, x_tile_budget=16 * 1024 * 1024):
    """Largest token tile that divides T, is a multiple of 8 (or == T), and keeps
    the double-buffered x tile within budget (safe for v7x's 64 MiB VMEM)."""
    cap = min(max_rows, max(8, x_tile_budget // max(1, 2 * D * itemsize)))
    if T <= cap:
        return T
    t = (cap // 8) * 8
    while t >= 8:
        if T % t == 0:
            return t
        t -= 8
    return T  # no aligned divisor: fall back to a single tile


def _vmem_budget_phase1(tile_t, D, E, x_dtype):
    itemsize = jnp.dtype(x_dtype).itemsize
    x_tile = tile_t * D * itemsize
    w_b = E * D * itemsize
    outs = 4 * E * tile_t * 4
    work = 16 * E * tile_t * 4 + 2 * tile_t * D * 4
    est = 2 * (x_tile + w_b + outs) + work + (2 << 20)
    return int(min(max(est, 32 << 20), 100 << 20))


def _vmem_budget_phase2(Eg, T, Cp):
    est = 2 * (2 * Eg * T * 4 + 2 * Eg * Cp * 4) + 16 * Eg * T * 4 + (2 << 20)
    return int(min(max(est, 32 << 20), 100 << 20))


# ---------------------------------------------------------------------------
# Wrapper
# ---------------------------------------------------------------------------
def topk_router_forward(x, weight, bias, *, k, expert_capacity,
                        router_dtype=jnp.float32):
    """x: (T, D); weight: (E, D) (torch nn.Linear layout); bias: (E,).

    Returns (logits, probs, expert_probs, expert_indices) matching
    TopKRouter.forward (expert_indices emitted as int32)."""
    T, D = x.shape
    E = weight.shape[0]
    k = min(k, E)
    C = T if expert_capacity == -1 else expert_capacity
    router_dtype = jnp.dtype(router_dtype)

    # ----- phase 1: token-tiled linear + softmax + top-k -------------------
    tile_t = _pick_token_tile(T, D, jnp.dtype(x.dtype).itemsize)
    n_tiles = T // tile_t
    b2 = bias.reshape(E, 1)
    # TODO(synk): for very large d_model add K-tiling over D with an f32
    # accumulator so the weight + x tiles stay inside v7x's 64 MiB VMEM.

    p1_kernel = functools.partial(_router_tokens_kernel, k=k,
                                  router_dtype=router_dtype)
    et_spec = pl.BlockSpec((E, tile_t), lambda i: (0, i))
    logits_T, probs_T, key_T, norm_T = pl.pallas_call(
        p1_kernel,
        out_shape=(
            jax.ShapeDtypeStruct((E, T), x.dtype),       # logits (expert-major)
            jax.ShapeDtypeStruct((E, T), router_dtype),  # probs  (expert-major)
            jax.ShapeDtypeStruct((E, T), jnp.float32),   # ranking key (unnorm | -1)
            jax.ShapeDtypeStruct((E, T), jnp.float32),   # renormalized top-k probs
        ),
        grid=(n_tiles,),
        in_specs=[
            pl.BlockSpec((tile_t, D), lambda i: (i, 0)),   # x: pipelined over tokens
            pl.BlockSpec((E, D), lambda i: (0, 0)),        # weight: resident
            pl.BlockSpec((E, 1), lambda i: (0, 0)),        # bias
        ],
        out_specs=(et_spec, et_spec, et_spec, et_spec),
        compiler_params=pltpu.CompilerParams(
            dimension_semantics=("parallel",),
            vmem_limit_bytes=_vmem_budget_phase1(tile_t, D, E, x.dtype)),
    )(x, weight, b2)

    # ----- phase 2: capacity-limited token -> expert assignment ------------
    Eg = 8 if E % 8 == 0 else E             # experts per grid step (sublane group)
    Cp = max(128, -(-C // 128) * 128)       # lane-dense (padded) capacity axis
    p2_kernel = functools.partial(_assign_experts_kernel, capacity=C)
    eprobs_pad, eidx_pad = pl.pallas_call(
        p2_kernel,
        out_shape=(
            jax.ShapeDtypeStruct((E, Cp), router_dtype),
            jax.ShapeDtypeStruct((E, Cp), jnp.int32),
        ),
        grid=(E // Eg,),
        in_specs=[
            pl.BlockSpec((Eg, T), lambda g: (g, 0)),
            pl.BlockSpec((Eg, T), lambda g: (g, 0)),
        ],
        out_specs=(
            pl.BlockSpec((Eg, Cp), lambda g: (g, 0)),
            pl.BlockSpec((Eg, Cp), lambda g: (g, 0)),
        ),
        compiler_params=pltpu.CompilerParams(
            dimension_semantics=("parallel",),
            vmem_limit_bytes=_vmem_budget_phase2(Eg, T, Cp)),
    )(key_T, norm_T)

    # Pure layout plumbing outside the kernels (kernel stores stay lane-dense).
    logits = logits_T.T
    probs = probs_T.T
    expert_probs = eprobs_pad[:, :C]
    expert_indices = eidx_pad[:, :C]
    # TODO(synk): torch returns int64 expert_indices; int32 is used here.
    return logits, probs, expert_probs, expert_indices


# ---------------------------------------------------------------------------
# Pure-numpy reference (same deterministic tie-breaking)
# ---------------------------------------------------------------------------
def _ref_forward(x, weight, bias, k, expert_capacity):
    x = np.asarray(x, np.float32)
    w = np.asarray(weight, np.float32)
    b = np.asarray(bias, np.float32)
    T = x.shape[0]
    E = w.shape[0]
    k = min(k, E)
    C = T if expert_capacity == -1 else expert_capacity
    logits = x @ w.T + b
    z = logits - logits.max(-1, keepdims=True)
    probs = np.exp(z)
    probs = probs / probs.sum(-1, keepdims=True)
    topk_ids = np.argsort(-probs, axis=-1, kind="stable")[:, :k]
    unnorm = np.take_along_axis(probs, topk_ids, axis=-1)
    norm = unnorm / unnorm.sum(-1, keepdims=True)
    flat_e = topk_ids.reshape(-1)
    flat_u = unnorm.reshape(-1)
    flat_p = norm.reshape(-1)
    flat_t = np.arange(T * k) // k
    expert_probs = np.zeros((E, C), np.float32)
    expert_indices = np.full((E, C), -1, np.int32)
    for e in range(E):
        msk = flat_e == e
        ct, cu, cp = flat_t[msk], flat_u[msk], flat_p[msk]
        if ct.size:
            keep = min(C, ct.size)
            sidx = np.argsort(-cu, kind="stable")[:keep]
            expert_probs[e, :keep] = cp[sidx]
            expert_indices[e, :keep] = ct[sidx]
    return logits, probs, expert_probs, expert_indices


if __name__ == "__main__":
    # Module config: d_model=32, num_experts=8, k=2, router_bias=True, router_dtype='float32'
    T, D, E = 8, 32, 8
    k = 2
    expert_capacity = 4

    key = jax.random.PRNGKey(0)
    kx, kw, kb = jax.random.split(key, 3)
    x = jax.random.normal(kx, (T, D), jnp.float32)
    bound = 1.0 / np.sqrt(D)                    # nn.Linear default init range
    weight = jax.random.uniform(kw, (E, D), jnp.float32, -bound, bound)
    bias = jax.random.uniform(kb, (E,), jnp.float32, -bound, bound)

    outs = topk_router_forward(x, weight, bias, k=k, expert_capacity=expert_capacity)
    outs = jax.block_until_ready(outs)
    logits, probs, eprobs, eidx = (np.asarray(o) for o in outs)

    r_logits, r_probs, r_eprobs, r_eidx = _ref_forward(x, weight, bias, k, expert_capacity)
    assert np.allclose(logits, r_logits, atol=1e-4, rtol=1e-4), "logits mismatch"
    assert np.allclose(probs, r_probs, atol=1e-5, rtol=1e-5), "probs mismatch"
    assert np.array_equal(eidx, r_eidx), "expert_indices mismatch"
    assert np.allclose(eprobs, r_eprobs, atol=1e-5, rtol=1e-5), "expert_probs mismatch"

    print("KERNEL_OK")
</pallas_src>

<mosaic_0001>
module attributes {stable_mosaic.version = 11 : i64} {
  func.func @_router_tokens_kernel(%arg0: i32, %arg1: memref<8x32xf32, #tpu.memory_space<vmem>>, %arg2: memref<8x32xf32, #tpu.memory_space<vmem>>, %arg3: memref<8x1xf32, #tpu.memory_space<vmem>>, %arg4: memref<8x8xf32, #tpu.memory_space<vmem>>, %arg5: memref<8x8xf32, #tpu.memory_space<vmem>>, %arg6: memref<8x8xf32, #tpu.memory_space<vmem>>, %arg7: memref<8x8xf32, #tpu.memory_space<vmem>>) attributes {dimension_semantics = [#tpu.dimension_semantics<parallel>], iteration_bounds = array<i64: 1>, scalar_prefetch = 0 : i64, scratch_operands = 0 : i64, tpu.core_type = #tpu.core_type<tc>, window_params = [{transform_indices = @transform_0, window_bounds = array<i64: 8, 32>}, {pipeline_mode = #tpu.pipeline_mode<synchronous>, transform_indices = @transform_1, window_bounds = array<i64: 8, 32>}, {pipeline_mode = #tpu.pipeline_mode<synchronous>, transform_indices = @transform_2, window_bounds = array<i64: 8, 1>}, {transform_indices = @transform_3, window_bounds = array<i64: 8, 8>}, {transform_indices = @transform_4, window_bounds = array<i64: 8, 8>}, {transform_indices = @transform_5, window_bounds = array<i64: 8, 8>}, {transform_indices = @transform_6, window_bounds = array<i64: 8, 8>}]} {
    %c0 = arith.constant 0 : index
    %c0_0 = arith.constant 0 : index
    %0 = vector.load %arg1[%c0, %c0_0] : memref<8x32xf32, #tpu.memory_space<vmem>>, vector<8x32xf32>
    %c0_1 = arith.constant 0 : index
    %c0_2 = arith.constant 0 : index
    %1 = vector.load %arg2[%c0_1, %c0_2] : memref<8x32xf32, #tpu.memory_space<vmem>>, vector<8x32xf32>
    %cst = arith.constant dense<0.000000e+00> : vector<8x8xf32>
    %2 = tpu.matmul %1, %0, %cst {dimension_numbers = #tpu.dot_dimension_numbers<[1], [1], [0], [0], [0, 0, 1, 0], [], []>} : vector<8x32xf32>, vector<8x32xf32>, vector<8x8xf32> -> vector<8x8xf32>
    %c0_3 = arith.constant 0 : index
    %c0_4 = arith.constant 0 : index
    %3 = vector.load %arg3[%c0_3, %c0_4] : memref<8x1xf32, #tpu.memory_space<vmem>>, vector<8x1xf32>
    %4 = vector.broadcast %3 : vector<8x1xf32> to vector<8x8xf32>
    %5 = arith.addf %2, %4 : vector<8x8xf32>
    %c0_5 = arith.constant 0 : index
    %c0_6 = arith.constant 0 : index
    %6 = vector.load %arg4[%c0_5, %c0_6] : memref<8x8xf32, #tpu.memory_space<vmem>>, vector<8x8xf32>
    tpu.vector_store %arg4[%c0_5, %c0_6], %5 {strides = array<i32>} : memref<8x8xf32, #tpu.memory_space<vmem>>, vector<8x8xf32>,
    %cst_7 = arith.constant dense<0xFF800000> : vector<8xf32>
    %7 = vector.multi_reduction <maximumf>, %5, %cst_7 [0] : vector<8x8xf32> to vector<8xf32>
    %8 = vector.shape_cast %7 : vector<8xf32> to vector<1x8xf32>
    %9 = vector.broadcast %8 : vector<1x8xf32> to vector<8x8xf32>
    %10 = arith.subf %5, %9 : vector<8x8xf32>
    %11 = math.exp %10 : vector<8x8xf32>
    %cst_8 = arith.constant dense<0.000000e+00> : vector<8xf32>
    %12 = vector.multi_reduction <add>, %11, %cst_8 [0] : vector<8x8xf32> to vector<8xf32>
    %13 = vector.shape_cast %12 : vector<8xf32> to vector<1x8xf32>
    %14 = vector.broadcast %13 : vector<1x8xf32> to vector<8x8xf32>
    %15 = arith.divf %11, %14 : vector<8x8xf32>
    %c0_9 = arith.constant 0 : index
    %c0_10 = arith.constant 0 : index
    %16 = vector.load %arg5[%c0_9, %c0_10] : memref<8x8xf32, #tpu.memory_space<vmem>>, vector<8x8xf32>
    tpu.vector_store %arg5[%c0_9, %c0_10], %15 {strides = array<i32>} : memref<8x8xf32, #tpu.memory_space<vmem>>, vector<8x8xf32>,
    %17 = tpu.iota {dimensions = array<i32: 0>} : vector<8x8xi32>
    %cst_11 = arith.constant 0.000000e+00 : f32
    %18 = vector.broadcast %cst_11 : f32 to vector<8x8xf32>
    %cst_12 = arith.constant dense<0xFF800000> : vector<8xf32>
    %19 = vector.multi_reduction <maximumf>, %15, %cst_12 [0] : vector<8x8xf32> to vector<8xf32>
    %20 = vector.shape_cast %19 : vector<8xf32> to vector<1x8xf32>
    %21 = vector.broadcast %20 : vector<1x8xf32> to vector<8x8xf32>
    %22 = arith.cmpf oeq, %15, %21 : vector<8x8xf32>
    %c8_i32 = arith.constant 8 : i32
    %23 = vector.broadcast %c8_i32 : i32 to vector<8x8xi32>
    %24 = arith.select %22, %17, %23 : vector<8x8xi1>, vector<8x8xi32>
    %cst_13 = arith.constant dense<2147483647> : vector<8xi32>
    %25 = vector.multi_reduction <minsi>, %24, %cst_13 [0] : vector<8x8xi32> to vector<8xi32>
    %26 = vector.shape_cast %25 : vector<8xi32> to vector<1x8xi32>
    %27 = vector.broadcast %26 : vector<1x8xi32> to vector<8x8xi32>
    %28 = arith.cmpi eq, %17, %27 : vector<8x8xi32>
    %29 = arith.extui %28 : vector<8x8xi1> to vector<8x8xi32>
    %30 = arith.sitofp %29 : vector<8x8xi32> to vector<8x8xf32>
    %31 = arith.addf %18, %30 : vector<8x8xf32>
    %32 = vector.broadcast %26 : vector<1x8xi32> to vector<8x8xi32>
    %33 = arith.cmpi eq, %17, %32 : vector<8x8xi32>
    %cst_14 = arith.constant 0xFF800000 : f32
    %34 = vector.broadcast %cst_14 : f32 to vector<8x8xf32>
    %35 = arith.select %33, %34, %15 : vector<8x8xi1>, vector<8x8xf32>
    %cst_15 = arith.constant dense<0xFF800000> : vector<8xf32>
    %36 = vector.multi_reduction <maximumf>, %35, %cst_15 [0] : vector<8x8xf32> to vector<8xf32>
    %37 = vector.shape_cast %36 : vector<8xf32> to vector<1x8xf32>
    %38 = vector.broadcast %37 : vector<1x8xf32> to vector<8x8xf32>
    %39 = arith.cmpf oeq, %35, %38 : vector<8x8xf32>
    %c8_i32_16 = arith.constant 8 : i32
    %40 = vector.broadcast %c8_i32_16 : i32 to vector<8x8xi32>
    %41 = arith.select %39, %17, %40 : vector<8x8xi1>, vector<8x8xi32>
    %cst_17 = arith.constant dense<2147483647> : vector<8xi32>
    %42 = vector.multi_reduction <minsi>, %41, %cst_17 [0] : vector<8x8xi32> to vector<8xi32>
    %43 = vector.shape_cast %42 : vector<8xi32> to vector<1x8xi32>
    %44 = vector.broadcast %43 : vector<1x8xi32> to vector<8x8xi32>
    %45 = arith.cmpi eq, %17, %44 : vector<8x8xi32>
    %46 = arith.extui %45 : vector<8x8xi1> to vector<8x8xi32>
    %47 = arith.sitofp %46 : vector<8x8xi32> to vector<8x8xf32>
    %48 = arith.addf %31, %47 : vector<8x8xf32>
    %49 = arith.mulf %48, %15 : vector<8x8xf32>
    %cst_18 = arith.constant dense<0.000000e+00> : vector<8xf32>
    %50 = vector.multi_reduction <add>, %49, %cst_18 [0] : vector<8x8xf32> to vector<8xf32>
    %51 = vector.shape_cast %50 : vector<8xf32> to vector<1x8xf32>
    %52 = vector.broadcast %51 : vector<1x8xf32> to vector<8x8xf32>
    %53 = arith.divf %49, %52 : vector<8x8xf32>
    %cst_19 = arith.constant 0.000000e+00 : f32
    %54 = vector.broadcast %cst_19 : f32 to vector<8x8xf32>
    %55 = arith.cmpf ogt, %48, %54 : vector<8x8xf32>
    %cst_20 = arith.constant -1.000000e+00 : f32
    %56 = vector.broadcast %cst_20 : f32 to vector<8x8xf32>
    %57 = arith.select %55, %49, %56 : vector<8x8xi1>, vector<8x8xf32>
    %c0_21 = arith.constant 0 : index
    %c0_22 = arith.constant 0 : index
    %58 = vector.load %arg6[%c0_21, %c0_22] : memref<8x8xf32, #tpu.memory_space<vmem>>, vector<8x8xf32>
    tpu.vector_store %arg6[%c0_21, %c0_22], %57 {strides = array<i32>} : memref<8x8xf32, #tpu.memory_space<vmem>>, vector<8x8xf32>,
    %c0_23 = arith.constant 0 : index
    %c0_24 = arith.constant 0 : index
    %59 = vector.load %arg7[%c0_23, %c0_24] : memref<8x8xf32, #tpu.memory_space<vmem>>, vector<8x8xf32>
    tpu.vector_store %arg7[%c0_23, %c0_24], %53 {strides = array<i32>} : memref<8x8xf32, #tpu.memory_space<vmem>>, vector<8x8xf32>,
    return
  }
  func.func @transform_0(%arg0: i32) -> (i32, i32) {
    %c0_i32 = arith.constant 0 : i32
    %c0_i32_0 = arith.constant 0 : i32
    return %arg0, %c0_i32 : i32, i32
  }
  func.func @transform_1(%arg0: i32) -> (i32, i32) {
    %c0_i32 = arith.constant 0 : i32
    %c0_i32_0 = arith.constant 0 : i32
    %c0_i32_1 = arith.constant 0 : i32
    return %c0_i32, %c0_i32_0 : i32, i32
  }
  func.func @transform_2(%arg0: i32) -> (i32, i32) {
    %c0_i32 = arith.constant 0 : i32
    %c0_i32_0 = arith.constant 0 : i32
    %c0_i32_1 = arith.constant 0 : i32
    return %c0_i32, %c0_i32_0 : i32, i32
  }
  func.func @transform_3(%arg0: i32) -> (i32, i32) {
    %c0_i32 = arith.constant 0 : i32
    %c0_i32_0 = arith.constant 0 : i32
    return %c0_i32, %arg0 : i32, i32
  }
  func.func @transform_4(%arg0: i32) -> (i32, i32) {
    %c0_i32 = arith.constant 0 : i32
    %c0_i32_0 = arith.constant 0 : i32
    return %c0_i32, %arg0 : i32, i32
  }
  func.func @transform_5(%arg0: i32) -> (i32, i32) {
    %c0_i32 = arith.constant 0 : i32
    %c0_i32_0 = arith.constant 0 : i32
    return %c0_i32, %arg0 : i32, i32
  }
  func.func @transform_6(%arg0: i32) -> (i32, i32) {
    %c0_i32 = arith.constant 0 : i32
    %c0_i32_0 = arith.constant 0 : i32
    return %c0_i32, %arg0 : i32, i32
  }
}

</mosaic_0001>

<llo_original>
// kernel: tpu_custom_call.1
$region0: #{tpu_custom_call.1}
  #allocation0 [shape = 'u32[]', space=smem, size = 0x4, offset = 0x4, fixed_abs, tag = 'smem constant byte address 0x4 - core index']
  #allocation1 [shape = 'u32[144,128]{1,0:T(1,128)}', space=vmem, size = 0x12000, scoped, tag = 'internal scratch']
  %s0 = inlined_call_operand.vmem [shape: f32[8,32], index: 0, kind: input, shape index: {}]
  %s1 = inlined_call_operand.hbm [shape: f32[8,32], index: 1, kind: input, shape index: {}]
  %s2 = inlined_call_operand.vmem [shape: f32[8,1], index: 2, kind: input, shape index: {}]
  %s3 = inlined_call_operand.hbm [shape: f32[8,8], index: 3, kind: output, shape index: {0}]
  %s4 = inlined_call_operand.hbm [shape: f32[8,8], index: 4, kind: output, shape index: {1}]
  %s5 = inlined_call_operand.hbm [shape: f32[8,8], index: 5, kind: output, shape index: {2}]
  %s6 = inlined_call_operand.hbm [shape: f32[8,8], index: 6, kind: output, shape index: {3}]
  %7 = xla_tuple %s3, %s4, %s5, %s6
  %s8 = sld [smem:[#allocation0]]
  $region50: #{tpu_custom_call.1} parent=0
    _
  %s10 = ssub.s32 1, %s8
  %s11 = scalar_select 0, %s10, %s8
  $region1: #{tpu_custom_call.1} parent=0
    #allocation2 [shape = 'u8[4096]{0}', space=vmem, size = 0x1000, scoped, tag = 'input window, operand 1, single buffered']
    #allocation3 [shape = 's32[1]{0}', space=sflag, size = 0x4, scoped, tag = 'scoped memory for tpu_custom_call.1']
    #allocation4 [shape = 's32[1]{0}', space=sflag, size = 0x4, scoped, tag = 'scoped memory for tpu_custom_call.1']
    #allocation5 [shape = 'u8[4096]{0}', space=vmem, size = 0x1000, scoped, tag = 'output window, operand 0, single buffered']
    #allocation6 [shape = 'u8[4096]{0}', space=vmem, size = 0x1000, scoped, tag = 'output window, operand 1, single buffered']
    #allocation7 [shape = 's32[1]{0}', space=sflag, size = 0x4, scoped, tag = 'scoped memory for tpu_custom_call.1']
    #allocation8 [shape = 'u8[4096]{0}', space=vmem, size = 0x1000, scoped, tag = 'output window, operand 2, single buffered']
    #allocation9 [shape = 'u8[4096]{0}', space=vmem, size = 0x1000, scoped, tag = 'output window, operand 3, single buffered']
    #allocation10 [shape = 's32[1]{0}', space=sflag, size = 0x4, scoped, tag = 'scoped memory for tpu_custom_call.1']
    %12 = vsyncpa [#allocation3], 0
    %13 = vsyncpa [#allocation4], 0
    %14 = vsyncpa [#allocation7], 0
    %15 = vsyncpa [#allocation10], 0
    // Predicated region
    $region2: #{tpu_custom_call.1} parent=1 // pred_check
      _
    $region3: #{tpu_custom_call.1} parent=1 // pred_check_branch
      %17 = sbr.rel (0) target = $region5
    $region4: #{tpu_custom_call.1} parent=1 // pred_region
      _
    $region5: #{tpu_custom_call.1} parent=1 // pred_fallthru
      _
    // Predicated region
    $region6: #{tpu_custom_call.1} parent=1 // pred_check
      _
    $region7: #{tpu_custom_call.1} parent=1 // pred_check_branch
      %19 = sbr.rel (0) target = $region9
    $region8: #{tpu_custom_call.1} parent=1 // pred_region
      %s21 = ssub.s32 128, 128
      %22 = vsyncadd [#allocation3], %s21
      %s24 = sshll.u32 [#allocation2], 4
      %s25 = int_to_ptr.vmem [resolvable:$true] %s24
      %27 = dma.hbm_to_vmem [thread:$0]  %s1, 128, %s25, [#allocation3]
    $region9: #{tpu_custom_call.1} parent=1 // pred_fallthru
      _
    // Predicated region
    $region10: #{tpu_custom_call.1} parent=1 // pred_check
      _
    $region11: #{tpu_custom_call.1} parent=1 // pred_check_branch
      %29 = sbr.rel (0) target = $region13
    $region12: #{tpu_custom_call.1} parent=1 // pred_region
      _
    $region13: #{tpu_custom_call.1} parent=1 // pred_fallthru
      _
    // Predicated region
    $region14: #{tpu_custom_call.1} parent=1 // pred_check
      _
    $region15: #{tpu_custom_call.1} parent=1 // pred_check_branch
      %31 = sbr.rel (0) target = $region17
    $region16: #{tpu_custom_call.1} parent=1 // pred_region
      %32 = dma.done [#allocation3], 128
    $region17: #{tpu_custom_call.1} parent=1 // pred_fallthru
      _
    %v33 = vld [vmem:[%s0] sm:$0xff]
    %v34 = vld [vmem:[#allocation2] sm:$0xff]
    %v35 = vld [vmem:[%s2] sm:$0xff]
    %37 = vset.pattern.permute.xlu0 0
    %38 = vperm.xlu0 %37, %v35
    %v39 = vpop.permute.xlu0 %38
    %vm41 = vcmask 261120
    %v43 = vsel %vm41, %v34, 0
    %v46 = vsel %vm41, %v33, 0
    %48 = vmatprep.subr.mxu0 0.0
    %49 = vmatpush1.xpose.msra.mxu0 %v46
    %50 = vmatprep.subr.mxu0 0.0
    %51 = vmatpush1.xpose.msra.mxu0 0.0
    %52 = vmatprep.subr.mxu0 0.0
    %53 = vmatpush1.xpose.msra.mxu0 0.0
    %54 = vmatprep.subr.mxu0 0.0
    %55 = vmatpush1.xpose.msra.mxu0 0.0
    %56 = vmatprep.subr.mxu0 0.0
    %57 = vmatpush1.xpose.msra.mxu0 0.0
    %58 = vmatprep.subr.mxu0 0.0
    %59 = vmatpush1.xpose.msra.mxu0 0.0
    %60 = vmatprep.subr.mxu0 0.0
    %61 = vmatpush1.xpose.msra.mxu0 0.0
    %62 = vmatprep.subr.mxu0 0.0
    %63 = vmatpush1.xpose.msra.mxu0 0.0
    %64 = vmatprep.subr.mxu0 0.0
    %65 = vmatpush1.xpose.msra.mxu0 0.0
    %66 = vmatprep.subr.mxu0 0.0
    %67 = vmatpush1.xpose.msra.mxu0 0.0
    %68 = vmatprep.subr.mxu0 0.0
    %69 = vmatpush1.xpose.msra.mxu0 0.0
    %70 = vmatprep.subr.mxu0 0.0
    %71 = vmatpush1.xpose.msra.mxu0 0.0
    %72 = vmatprep.subr.mxu0 0.0
    %73 = vmatpush1.xpose.msra.mxu0 0.0
    %74 = vmatprep.subr.mxu0 0.0
    %75 = vmatpush1.xpose.msra.mxu0 0.0
    %76 = vmatprep.subr.mxu0 0.0
    %77 = vmatpush1.xpose.msra.mxu0 0.0
    %78 = vmatprep.subr.mxu0 0.0
    %79 = vmatpush1.xpose.msra.mxu0 0.0
    %80 = vmatprep.subr.mxu0 0.0
    %81 = vmatpush1.xpose.msra.mxu0 0.0
    %82 = vmatprep.subr.mxu0 0.0
    %83 = vmatpush1.xpose.msra.mxu0 0.0
    %84 = vmatprep.subr.mxu0 0.0
    %85 = vmatpush1.xpose.msra.mxu0 0.0
    %86 = vmatprep.subr.mxu0 0.0
    %87 = vmatpush1.xpose.msra.mxu0 0.0
    %88 = vmatprep.subr.mxu0 0.0
    %89 = vmatpush1.xpose.msra.mxu0 0.0
    %90 = vmatprep.subr.mxu0 0.0
    %91 = vmatpush1.xpose.msra.mxu0 0.0
    %92 = vmatprep.subr.mxu0 0.0
    %93 = vmatpush1.xpose.msra.mxu0 0.0
    %94 = vmatprep.subr.mxu0 0.0
    %95 = vmatpush1.xpose.msra.mxu0 0.0
    %96 = vmatprep.subr.mxu0 0.0
    %97 = vmatpush1.xpose.msra.mxu0 0.0
    %98 = vmatprep.subr.mxu0 0.0
    %99 = vmatpush1.xpose.msra.mxu0 0.0
    %100 = vmatprep.subr.mxu0 0.0
    %101 = vmatpush1.xpose.msra.mxu0 0.0
    %102 = vmatprep.subr.mxu0 0.0
    %103 = vmatpush1.xpose.msra.mxu0 0.0
    %104 = vmatprep.subr.mxu0 0.0
    %105 = vmatpush1.xpose.msra.mxu0 0.0
    %106 = vmatprep.subr.mxu0 0.0
    %107 = vmatpush1.xpose.msra.mxu0 0.0
    %108 = vmatprep.subr.mxu0 0.0
    %109 = vmatpush1.xpose.msra.mxu0 0.0
    %110 = vmatprep.subr.mxu0 0.0
    %111 = vmatpush1.xpose.msra.mxu0 0.0
    %112 = vmatprep.mubr.f32.mxu0 0.0
    %113 = vmatmul.mubr.f32.gmra.mrb[0].mxu0 %v43
    %v114 = vpop.f32.mrb[0].mxu0
    %v115 = vadd.f32 %v39, %v114
    %v116 = vpop.f32.mrb[0].mxu0
    %117 = vdwg.mxu0
    %vm118 = vcmask 64512
    %119 = vst.msk [vmem:[#allocation5] sm:$0xff] %vm118, %v115
    %v120 = vsel %vm118, %v115, -inf
    %v121 = vrot.slane %v120, 4
    %v122 = vmax.f32 %v120, %v121
    %v123 = vrot.slane %v122, 2
    %v124 = vmax.f32 %v122, %v123
    %v125 = vrot.slane %v124, 1
    %v126 = vmax.f32 %v124, %v125
    %v127 = vsub.f32 %v115, %v126
    %v128 = vmul.f32 %v127, 1.442695
    %v129 = vpow.pop %v128
    %v130 = vsel %vm118, %v129, 0.0
    %v131 = vrot.slane %v130, 4
    %v132 = vadd.f32 %v130, %v131
    %v133 = vrot.slane %v132, 2
    %v134 = vadd.f32 %v132, %v133
    %v135 = vrot.slane %v134, 1
    %v136 = vadd.f32 %v134, %v135
    %v137 = vrcp.pop %v136
    %v138 = vmul.f32 %v129, %v137
    %139 = vst.msk [vmem:[#allocation6] sm:$0xff] %vm118, %v138
    %v140 = vlaneseq
    %v141 = vshrl.u32 %v140, 7
    %v142 = vsel %vm118, %v138, -inf
    %v143 = vrot.slane %v142, 4
    %v144 = vmax.f32 %v142, %v143
    %v145 = vrot.slane %v144, 2
    %v146 = vmax.f32 %v144, %v145
    %v147 = vrot.slane %v146, 1
    %v148 = vmax.f32 %v146, %v147
    %vm149 = vcmp.eq.f32.partialorder %v138, %v148
    %v150 = vsel %vm149, %v141, 8
    %v151 = vsel %vm118, %v150, 2147483647
    %v152 = vrot.slane %v151, 4
    %vm153 = vcmp.lt.s32.totalorder %v151, %v152
    %v154 = vsel %vm153, %v151, %v152
    %v155 = vrot.slane %v154, 2
    %vm156 = vcmp.lt.s32.totalorder %v154, %v155
    %v157 = vsel %vm156, %v154, %v155
    %v158 = vrot.slane %v157, 1
    %vm159 = vcmp.lt.s32.totalorder %v157, %v158
    %v160 = vsel %vm159, %v157, %v158
    %vm161 = vcmp.eq.s32.totalorder %v141, %v160
    %v162 = vsel %vm161, 1, 0
    %v163 = vcvt.s32.f32 %v162
    %v164 = vadd.f32 %v163, 0.0
    %v165 = vsel %vm161, -inf, %v138
    %v166 = vsel %vm118, %v165, -inf
    %v167 = vrot.slane %v166, 4
    %v168 = vmax.f32 %v166, %v167
    %v169 = vrot.slane %v168, 2
    %v170 = vmax.f32 %v168, %v169
    %v171 = vrot.slane %v170, 1
    %v172 = vmax.f32 %v170, %v171
    %vm173 = vcmp.eq.f32.partialorder %v165, %v172
    %v174 = vsel %vm173, %v141, 8
    %v175 = vsel %vm118, %v174, 2147483647
    %v176 = vrot.slane %v175, 4
    %vm177 = vcmp.lt.s32.totalorder %v175, %v176
    %v178 = vsel %vm177, %v175, %v176
    %v179 = vrot.slane %v178, 2
    %vm180 = vcmp.lt.s32.totalorder %v178, %v179
    %v181 = vsel %vm180, %v178, %v179
    %v182 = vrot.slane %v181, 1
    %vm183 = vcmp.lt.s32.totalorder %v181, %v182
    %v184 = vsel %vm183, %v181, %v182
    %vm185 = vcmp.eq.s32.totalorder %v141, %v184
    %v186 = vsel %vm185, 1, 0
    %v187 = vcvt.s32.f32 %v186
    %v188 = vadd.f32 %v164, %v187
    %v189 = vmul.f32 %v188, %v138
    %v190 = vsel %vm118, %v189, 0.0
    %v191 = vrot.slane %v190, 4
    %v192 = vadd.f32 %v190, %v191
    %v193 = vrot.slane %v192, 2
    %v194 = vadd.f32 %v192, %v193
    %v195 = vrot.slane %v194, 1
    %v196 = vadd.f32 %v194, %v195
    %v197 = vrcp.pop %v196
    %v198 = vmul.f32 %v189, %v197
    %vm199 = vcmp.gt.f32.partialorder %v188, 0.0
    %v200 = vsel %vm199, %v189, -1.0
    %201 = vst.msk [vmem:[#allocation8] sm:$0xff] %vm118, %v200
    %202 = vst.msk [vmem:[#allocation9] sm:$0xff] %vm118, %v198
    // Predicated region
    $region18: #{tpu_custom_call.1} parent=1 // pred_check
      _
    $region19: #{tpu_custom_call.1} parent=1 // pred_check_branch
      %204 = sbr.rel (0) target = $region21
    $region20: #{tpu_custom_call.1} parent=1 // pred_region
      %s206 = ssub.s32 128, 128
      %207 = vsyncadd [#allocation4], %s206
      %s209 = sshll.u32 [#allocation5], 4
      %s210 = int_to_ptr.vmem [resolvable:$true] %s209
      %212 = dma.vmem_to_hbm [thread:$0]  %s210, 128, %s3, [#allocation4]
    $region21: #{tpu_custom_call.1} parent=1 // pred_fallthru
      _
    // Predicated region
    $region22: #{tpu_custom_call.1} parent=1 // pred_check
      _
    $region23: #{tpu_custom_call.1} parent=1 // pred_check_branch
      %214 = sbr.rel (0) target = $region25
    $region24: #{tpu_custom_call.1} parent=1 // pred_region
      %s216 = ssub.s32 128, 128
      %217 = vsyncadd [#allocation7], %s216
      %s219 = sshll.u32 [#allocation6], 4
      %s220 = int_to_ptr.vmem [resolvable:$true] %s219
      %222 = dma.vmem_to_hbm [thread:$0]  %s220, 128, %s4, [#allocation7]
    $region25: #{tpu_custom_call.1} parent=1 // pred_fallthru
      _
    // Predicated region
    $region26: #{tpu_custom_call.1} parent=1 // pred_check
      _
    $region27: #{tpu_custom_call.1} parent=1 // pred_check_branch
      %224 = sbr.rel (0) target = $region29
    $region28: #{tpu_custom_call.1} parent=1 // pred_region
      %s226 = ssub.s32 128, 128
      %227 = vsyncadd [#allocation7], %s226
      %s229 = sshll.u32 [#allocation8], 4
      %s230 = int_to_ptr.vmem [resolvable:$true] %s229
      %232 = dma.vmem_to_hbm [thread:$0]  %s230, 128, %s5, [#allocation7]
    $region29: #{tpu_custom_call.1} parent=1 // pred_fallthru
      _
    // Predicated region
    $region30: #{tpu_custom_call.1} parent=1 // pred_check
      _
    $region31: #{tpu_custom_call.1} parent=1 // pred_check_branch
      %234 = sbr.rel (0) target = $region33
    $region32: #{tpu_custom_call.1} parent=1 // pred_region
      %s236 = ssub.s32 128, 128
      %237 = vsyncadd [#allocation10], %s236
      %s239 = sshll.u32 [#allocation9], 4
      %s240 = int_to_ptr.vmem [resolvable:$true] %s239
      %242 = dma.vmem_to_hbm [thread:$0]  %s240, 128, %s6, [#allocation10]
    $region33: #{tpu_custom_call.1} parent=1 // pred_fallthru
      _
    // Predicated region
    $region34: #{tpu_custom_call.1} parent=1 // pred_check
      _
    $region35: #{tpu_custom_call.1} parent=1 // pred_check_branch
      %244 = sbr.rel (0) target = $region37
    $region36: #{tpu_custom_call.1} parent=1 // pred_region
      %245 = dma.done [#allocation4], 128
    $region37: #{tpu_custom_call.1} parent=1 // pred_fallthru
      _
    // Predicated region
    $region38: #{tpu_custom_call.1} parent=1 // pred_check
      _
    $region39: #{tpu_custom_call.1} parent=1 // pred_check_branch
      %247 = sbr.rel (0) target = $region41
    $region40: #{tpu_custom_call.1} parent=1 // pred_region
      %248 = dma.done [#allocation7], 128
    $region41: #{tpu_custom_call.1} parent=1 // pred_fallthru
      _
    // Predicated region
    $region42: #{tpu_custom_call.1} parent=1 // pred_check
      _
    $region43: #{tpu_custom_call.1} parent=1 // pred_check_branch
      %250 = sbr.rel (0) target = $region45
    $region44: #{tpu_custom_call.1} parent=1 // pred_region
      %251 = dma.done [#allocation7], 128
    $region45: #{tpu_custom_call.1} parent=1 // pred_fallthru
      _
    // Predicated region
    $region46: #{tpu_custom_call.1} parent=1 // pred_check
      _
    $region47: #{tpu_custom_call.1} parent=1 // pred_check_branch
      %253 = sbr.rel (0) target = $region49
    $region48: #{tpu_custom_call.1} parent=1 // pred_region
      %254 = dma.done [#allocation10], 128
    $region49: #{tpu_custom_call.1} parent=1 // pred_fallthru
      _
    %255 = vsyncpa [#allocation3], 1
    %256 = vsyncpa [#allocation4], 1
    %257 = vsyncpa [#allocation7], 1
    %258 = vsyncpa [#allocation10], 1

</llo_original>
